<compile_context>
chip_gen: v5e
topology: v5e:2x2
jax: 0.10.0
libtpu: 0.0.40
codegen_flags: <defaults>
</compile_context>

<pallas_src>
import math

import jax
import jax.numpy as jnp
from jax.experimental import pallas as pl
from jax.experimental.pallas import tpu as pltpu

LANES = 128
MAX_TILE_R = 8192          # (8192, 128) f32 = 4 MiB / input / buffer
POS_WEIGHT = 0.7
SMOOTH = 1.0
NUM_SPLITS = 2             # megacore split (helps v7x); harmless elsewhere
VMEM_LIMIT_BYTES = 40 << 20


def _combined_loss_kernel(pred_ref, targ_ref, out_ref):
    """Accumulate per-lane partial sums of [bce, x*t, x, t] into out_ref.

    pred_ref / targ_ref: (TILE_R, LANES) blocks (any float dtype; upcast to f32).
    out_ref:             (1, 4, 8, LANES) f32, resident across the inner grid axis.
    """
    j = pl.program_id(1)

    @pl.when(j == 0)
    def _():
        out_ref[...] = jnp.zeros_like(out_ref)

    x = pred_ref[...].astype(jnp.float32)
    t = targ_ref[...].astype(jnp.float32)

    # Numerically stable softplus(-x) = max(-x, 0) + log1p(exp(-|x|))  (EUP work,
    # hidden under the HBM-bound DMA stream).
    sp_negx = jnp.maximum(-x, 0.0) + jnp.log1p(jnp.exp(-jnp.abs(x)))
    # BCE-with-logits per element (pos_weight on the positive term).
    bce = (1.0 - t) * x + (POS_WEIGHT * t + 1.0 - t) * sp_negx

    def part(v):
        # (TILE_R, LANES) -> (8, LANES): tile-aligned reshape + leading-axis sum,
        # i.e. pure per-vreg VPU adds, no cross-lane/XLU work.
        return jnp.sum(v.reshape(-1, 8, LANES), axis=0)

    out_ref[0, 0, :, :] += part(bce)
    out_ref[0, 1, :, :] += part(x * t)
    out_ref[0, 2, :, :] += part(x)
    out_ref[0, 3, :, :] += part(t)
    # TODO(synk): L1 loss in the PyTorch module is computed but never used in the
    # return -> intentionally not implemented.


def _round_up(x, m):
    return ((x + m - 1) // m) * m


def _sublane_multiple(dtype):
    # minimal second-to-last tile dim: 8 for 4-byte, 16 for 2-byte, 32 for 1-byte dtypes
    return max(8, 32 // jnp.dtype(dtype).itemsize)


def combined_loss(pred, target, *, smooth=SMOOTH):
    assert pred.shape == target.shape
    n = pred.size

    pf = pred.reshape(-1)      # keep HBM dtype; upcast to f32 inside the kernel
    tf = target.reshape(-1)

    mult = max(_sublane_multiple(pf.dtype), _sublane_multiple(tf.dtype))
    rows_needed = pl.cdiv(n, LANES)
    tile_r = min(MAX_TILE_R, _round_up(rows_needed, mult))
    tiles = pl.cdiv(rows_needed, tile_r)
    num_splits = NUM_SPLITS if tiles >= NUM_SPLITS else 1
    tiles_per_split = pl.cdiv(tiles, num_splits)
    padded_rows = num_splits * tiles_per_split * tile_r
    pad = padded_rows * LANES - n

    # Pad only when the flat size does not already tile evenly (common power-of-2
    # NCHW shapes need no pad).  Padded zeros contribute exactly log(2) each to the
    # BCE sum (corrected analytically below) and 0 to every dice sum -> no mask stream.
    if pad:
        pf = jnp.pad(pf, (0, pad))
        tf = jnp.pad(tf, (0, pad))
    pf = pf.reshape(padded_rows, LANES)
    tf = tf.reshape(padded_rows, LANES)

    in_map = lambda c, j: (c * tiles_per_split + j, 0)
    partials = pl.pallas_call(
        _combined_loss_kernel,
        out_shape=jax.ShapeDtypeStruct((num_splits, 4, 8, LANES), jnp.float32),
        grid_spec=pltpu.PrefetchScalarGridSpec(
            num_scalar_prefetch=0,
            grid=(num_splits, tiles_per_split),
            in_specs=[
                pl.BlockSpec((tile_r, LANES), in_map),
                pl.BlockSpec((tile_r, LANES), in_map),
            ],
            out_specs=pl.BlockSpec((1, 4, 8, LANES), lambda c, j: (c, 0, 0, 0)),
        ),
        compiler_params=pltpu.CompilerParams(
            dimension_semantics=("parallel", "arbitrary"),
            vmem_limit_bytes=VMEM_LIMIT_BYTES),
    )(pf, tf)

    # Tiny epilogue in plain JAX: combine per-split / per-lane partials (a few KiB).
    sums = jnp.sum(partials, axis=(0, 2, 3))          # [sum(bce), sum(x*t), sum(x), sum(t)]
    bce_mean = (sums[0] - pad * math.log(2.0)) / n    # remove padded zeros' BCE contribution
    dice = 1.0 - (2.0 * sums[1] + smooth) / (sums[2] + sums[3] + smooth)
    return (2.0 * bce_mean + dice) / 3.0


def _reference_loss(pred, target, *, pos_weight=POS_WEIGHT, smooth=SMOOTH):
    x = pred.astype(jnp.float32)
    t = target.astype(jnp.float32)
    sp_negx = jnp.maximum(-x, 0.0) + jnp.log1p(jnp.exp(-jnp.abs(x)))
    bce = jnp.mean((1.0 - t) * x + (pos_weight * t + 1.0 - t) * sp_negx)
    inter = jnp.sum(x * t)
    dice = 1.0 - (2.0 * inter + smooth) / (jnp.sum(x) + jnp.sum(t) + smooth)
    return (2.0 * bce + dice) / 3.0


if __name__ == "__main__":
    key = jax.random.PRNGKey(0)
    k1, k2 = jax.random.split(key)
    # NCHW logits / binary targets: batch=2, channels=4, spatial=16x16
    pred = jax.random.normal(k1, (2, 4, 16, 16), dtype=jnp.float32)
    target = (jax.random.uniform(k2, (2, 4, 16, 16)) > 0.5).astype(jnp.float32)

    loss = jax.block_until_ready(combined_loss(pred, target))
    ref = jax.block_until_ready(_reference_loss(pred, target))
    assert jnp.allclose(loss, ref, rtol=1e-5, atol=1e-5), (loss, ref)
    print("KERNEL_OK")
</pallas_src>

<mosaic_0001>
module attributes {stable_mosaic.version = 11 : i64} {
  func.func @_combined_loss_kernel(%arg0: i32, %arg1: i32, %arg2: memref<16x128xf32, #tpu.memory_space<vmem>>, %arg3: memref<16x128xf32, #tpu.memory_space<vmem>>, %arg4: memref<1x4x8x128xf32, #tpu.memory_space<vmem>>) attributes {dimension_semantics = [#tpu.dimension_semantics<parallel>, #tpu.dimension_semantics<arbitrary>], iteration_bounds = array<i64: 1, 1>, scalar_prefetch = 0 : i64, scratch_operands = 0 : i64, tpu.core_type = #tpu.core_type<tc>, window_params = [{transform_indices = @transform_0, window_bounds = array<i64: 16, 128>}, {transform_indices = @transform_1, window_bounds = array<i64: 16, 128>}, {transform_indices = @transform_2, window_bounds = array<i64: 1, 4, 8, 128>}]} {
    %c0_i32 = arith.constant 0 : i32
    %0 = arith.cmpi eq, %arg1, %c0_i32 : i32
    %1 = arith.extui %0 : i1 to i32
    %c0_i32_0 = arith.constant 0 : i32
    %2 = arith.cmpi ne, %1, %c0_i32_0 : i32
    scf.if %2 {
      %cst_42 = arith.constant 0.000000e+00 : f32
      %58 = vector.broadcast %cst_42 : f32 to vector<1x4x8x128xf32>
      %c0_43 = arith.constant 0 : index
      %c0_44 = arith.constant 0 : index
      %c0_45 = arith.constant 0 : index
      %c0_46 = arith.constant 0 : index
      %59 = vector.load %arg4[%c0_43, %c0_44, %c0_45, %c0_46] : memref<1x4x8x128xf32, #tpu.memory_space<vmem>>, vector<1x4x8x128xf32>
      tpu.vector_store %arg4[%c0_43, %c0_44, %c0_45, %c0_46], %58 {strides = array<i32>} : memref<1x4x8x128xf32, #tpu.memory_space<vmem>>, vector<1x4x8x128xf32>,
    } else {
    }
    %c0 = arith.constant 0 : index
    %c0_1 = arith.constant 0 : index
    %3 = vector.load %arg2[%c0, %c0_1] : memref<16x128xf32, #tpu.memory_space<vmem>>, vector<16x128xf32>
    %c0_2 = arith.constant 0 : index
    %c0_3 = arith.constant 0 : index
    %4 = vector.load %arg3[%c0_2, %c0_3] : memref<16x128xf32, #tpu.memory_space<vmem>>, vector<16x128xf32>
    %cst = arith.constant 0.000000e+00 : f32
    %5 = vector.broadcast %cst : f32 to vector<16x128xf32>
    %6 = arith.subf %5, %3 : vector<16x128xf32>
    %cst_4 = arith.constant 0.000000e+00 : f32
    %7 = vector.broadcast %cst_4 : f32 to vector<16x128xf32>
    %8 = arith.maximumf %6, %7 : vector<16x128xf32>
    %9 = math.absf %3 : vector<16x128xf32>
    %cst_5 = arith.constant 0.000000e+00 : f32
    %10 = vector.broadcast %cst_5 : f32 to vector<16x128xf32>
    %11 = arith.subf %10, %9 : vector<16x128xf32>
    %12 = math.exp %11 : vector<16x128xf32>
    %13 = math.log1p %12 : vector<16x128xf32>
    %14 = arith.addf %8, %13 : vector<16x128xf32>
    %cst_6 = arith.constant 1.000000e+00 : f32
    %15 = vector.broadcast %cst_6 : f32 to vector<16x128xf32>
    %16 = arith.subf %15, %4 : vector<16x128xf32>
    %17 = arith.mulf %16, %3 : vector<16x128xf32>
    %cst_7 = arith.constant 0.699999988 : f32
    %18 = vector.broadcast %cst_7 : f32 to vector<16x128xf32>
    %19 = arith.mulf %18, %4 : vector<16x128xf32>
    %cst_8 = arith.constant 1.000000e+00 : f32
    %20 = vector.broadcast %cst_8 : f32 to vector<16x128xf32>
    %21 = arith.addf %19, %20 : vector<16x128xf32>
    %22 = arith.subf %21, %4 : vector<16x128xf32>
    %23 = arith.mulf %22, %14 : vector<16x128xf32>
    %24 = arith.addf %17, %23 : vector<16x128xf32>
    %c0_9 = arith.constant 0 : index
    %c0_10 = arith.constant 0 : index
    %c0_11 = arith.constant 0 : index
    %c0_12 = arith.constant 0 : index
    %25 = vector.load %arg4[%c0_9, %c0_10, %c0_11, %c0_12] : memref<1x4x8x128xf32, #tpu.memory_space<vmem>>, vector<1x1x8x128xf32>
    %26 = vector.shape_cast %25 : vector<1x1x8x128xf32> to vector<8x128xf32>
    %27 = vector.shape_cast %24 : vector<16x128xf32> to vector<2x8x128xf32>
    %cst_13 = arith.constant dense<0.000000e+00> : vector<8x128xf32>
    %28 = vector.multi_reduction <add>, %27, %cst_13 [0] : vector<2x8x128xf32> to vector<8x128xf32>
    %29 = arith.addf %26, %28 : vector<8x128xf32>
    %c0_14 = arith.constant 0 : index
    %c0_15 = arith.constant 0 : index
    %c0_16 = arith.constant 0 : index
    %c0_17 = arith.constant 0 : index
    %30 = vector.load %arg4[%c0_14, %c0_15, %c0_16, %c0_17] : memref<1x4x8x128xf32, #tpu.memory_space<vmem>>, vector<1x1x8x128xf32>
    %31 = vector.shape_cast %30 : vector<1x1x8x128xf32> to vector<8x128xf32>
    %32 = vector.shape_cast %29 : vector<8x128xf32> to vector<1x1x8x128xf32>
    tpu.vector_store %arg4[%c0_14, %c0_15, %c0_16, %c0_17], %32 {strides = array<i32>} : memref<1x4x8x128xf32, #tpu.memory_space<vmem>>, vector<1x1x8x128xf32>,
    %c0_18 = arith.constant 0 : index
    %c1 = arith.constant 1 : index
    %c0_19 = arith.constant 0 : index
    %c0_20 = arith.constant 0 : index
    %33 = vector.load %arg4[%c0_18, %c1, %c0_19, %c0_20] : memref<1x4x8x128xf32, #tpu.memory_space<vmem>>, vector<1x1x8x128xf32>
    %34 = vector.shape_cast %33 : vector<1x1x8x128xf32> to vector<8x128xf32>
    %35 = arith.mulf %3, %4 : vector<16x128xf32>
    %36 = vector.shape_cast %35 : vector<16x128xf32> to vector<2x8x128xf32>
    %cst_21 = arith.constant dense<0.000000e+00> : vector<8x128xf32>
    %37 = vector.multi_reduction <add>, %36, %cst_21 [0] : vector<2x8x128xf32> to vector<8x128xf32>
    %38 = arith.addf %34, %37 : vector<8x128xf32>
    %c0_22 = arith.constant 0 : index
    %c1_23 = arith.constant 1 : index
    %c0_24 = arith.constant 0 : index
    %c0_25 = arith.constant 0 : index
    %39 = vector.load %arg4[%c0_22, %c1_23, %c0_24, %c0_25] : memref<1x4x8x128xf32, #tpu.memory_space<vmem>>, vector<1x1x8x128xf32>
    %40 = vector.shape_cast %39 : vector<1x1x8x128xf32> to vector<8x128xf32>
    %41 = vector.shape_cast %38 : vector<8x128xf32> to vector<1x1x8x128xf32>
    tpu.vector_store %arg4[%c0_22, %c1_23, %c0_24, %c0_25], %41 {strides = array<i32>} : memref<1x4x8x128xf32, #tpu.memory_space<vmem>>, vector<1x1x8x128xf32>,
    %c0_26 = arith.constant 0 : index
    %c2 = arith.constant 2 : index
    %c0_27 = arith.constant 0 : index
    %c0_28 = arith.constant 0 : index
    %42 = vector.load %arg4[%c0_26, %c2, %c0_27, %c0_28] : memref<1x4x8x128xf32, #tpu.memory_space<vmem>>, vector<1x1x8x128xf32>
    %43 = vector.shape_cast %42 : vector<1x1x8x128xf32> to vector<8x128xf32>
    %44 = vector.shape_cast %3 : vector<16x128xf32> to vector<2x8x128xf32>
    %cst_29 = arith.constant dense<0.000000e+00> : vector<8x128xf32>
    %45 = vector.multi_reduction <add>, %44, %cst_29 [0] : vector<2x8x128xf32> to vector<8x128xf32>
    %46 = arith.addf %43, %45 : vector<8x128xf32>
    %c0_30 = arith.constant 0 : index
    %c2_31 = arith.constant 2 : index
    %c0_32 = arith.constant 0 : index
    %c0_33 = arith.constant 0 : index
    %47 = vector.load %arg4[%c0_30, %c2_31, %c0_32, %c0_33] : memref<1x4x8x128xf32, #tpu.memory_space<vmem>>, vector<1x1x8x128xf32>
    %48 = vector.shape_cast %47 : vector<1x1x8x128xf32> to vector<8x128xf32>
    %49 = vector.shape_cast %46 : vector<8x128xf32> to vector<1x1x8x128xf32>
    tpu.vector_store %arg4[%c0_30, %c2_31, %c0_32, %c0_33], %49 {strides = array<i32>} : memref<1x4x8x128xf32, #tpu.memory_space<vmem>>, vector<1x1x8x128xf32>,
    %c0_34 = arith.constant 0 : index
    %c3 = arith.constant 3 : index
    %c0_35 = arith.constant 0 : index
    %c0_36 = arith.constant 0 : index
    %50 = vector.load %arg4[%c0_34, %c3, %c0_35, %c0_36] : memref<1x4x8x128xf32, #tpu.memory_space<vmem>>, vector<1x1x8x128xf32>
    %51 = vector.shape_cast %50 : vector<1x1x8x128xf32> to vector<8x128xf32>
    %52 = vector.shape_cast %4 : vector<16x128xf32> to vector<2x8x128xf32>
    %cst_37 = arith.constant dense<0.000000e+00> : vector<8x128xf32>
    %53 = vector.multi_reduction <add>, %52, %cst_37 [0] : vector<2x8x128xf32> to vector<8x128xf32>
    %54 = arith.addf %51, %53 : vector<8x128xf32>
    %c0_38 = arith.constant 0 : index
    %c3_39 = arith.constant 3 : index
    %c0_40 = arith.constant 0 : index
    %c0_41 = arith.constant 0 : index
    %55 = vector.load %arg4[%c0_38, %c3_39, %c0_40, %c0_41] : memref<1x4x8x128xf32, #tpu.memory_space<vmem>>, vector<1x1x8x128xf32>
    %56 = vector.shape_cast %55 : vector<1x1x8x128xf32> to vector<8x128xf32>
    %57 = vector.shape_cast %54 : vector<8x128xf32> to vector<1x1x8x128xf32>
    tpu.vector_store %arg4[%c0_38, %c3_39, %c0_40, %c0_41], %57 {strides = array<i32>} : memref<1x4x8x128xf32, #tpu.memory_space<vmem>>, vector<1x1x8x128xf32>,
    return
  }
  func.func @transform_0(%arg0: i32, %arg1: i32) -> (i32, i32) {
    %c1_i32 = arith.constant 1 : i32
    %0 = arith.muli %arg0, %c1_i32 : i32
    %1 = arith.addi %0, %arg1 : i32
    %c0_i32 = arith.constant 0 : i32
    %c0_i32_0 = arith.constant 0 : i32
    return %1, %c0_i32 : i32, i32
  }
  func.func @transform_1(%arg0: i32, %arg1: i32) -> (i32, i32) {
    %c1_i32 = arith.constant 1 : i32
    %0 = arith.muli %arg0, %c1_i32 : i32
    %1 = arith.addi %0, %arg1 : i32
    %c0_i32 = arith.constant 0 : i32
    %c0_i32_0 = arith.constant 0 : i32
    return %1, %c0_i32 : i32, i32
  }
  func.func @transform_2(%arg0: i32, %arg1: i32) -> (i32, i32, i32, i32) {
    %c0_i32 = arith.constant 0 : i32
    %c0_i32_0 = arith.constant 0 : i32
    %c0_i32_1 = arith.constant 0 : i32
    %c0_i32_2 = arith.constant 0 : i32
    return %arg0, %c0_i32, %c0_i32_0, %c0_i32_1 : i32, i32, i32, i32
  }
}

</mosaic_0001>

<llo_original>
// kernel: tpu_custom_call.1
$region0: #{tpu_custom_call.1}
  #allocation0 [shape = 'u32[]', space=smem, size = 0x4, offset = 0x4, fixed_abs, tag = 'smem constant byte address 0x4 - core index']
  #allocation1 [shape = 'u32[72,128]{1,0:T(1,128)}', space=vmem, size = 0x9000, scoped, tag = 'internal scratch']
  %s0 = inlined_call_operand.hbm [shape: f32[16,128], index: 0, kind: input, shape index: {}]
  %s1 = inlined_call_operand.hbm [shape: f32[16,128], index: 1, kind: input, shape index: {}]
  %s2 = inlined_call_operand.hbm [shape: f32[1,4,8,128], index: 2, kind: output, shape index: {}]
  %s3 = sld [smem:[#allocation0]]
  $region30: #{tpu_custom_call.1} parent=0
    _
  %s5 = ssub.s32 1, %s3
  %s6 = scalar_select 0, %s5, %s3
  $region1: #{tpu_custom_call.1} parent=0
    #allocation2 [shape = 'u8[8192]{0}', space=vmem, size = 0x2000, scoped, tag = 'input window, operand 0, single buffered']
    #allocation3 [shape = 's32[1]{0}', space=sflag, size = 0x4, scoped, tag = 'scoped memory for tpu_custom_call.1']
    #allocation4 [shape = 's32[1]{0}', space=sflag, size = 0x4, scoped, tag = 'scoped memory for tpu_custom_call.1']
    #allocation5 [shape = 'u8[8192]{0}', space=vmem, size = 0x2000, scoped, tag = 'input window, operand 1, single buffered']
    #allocation6 [shape = 's32[1]{0}', space=sflag, size = 0x4, scoped, tag = 'scoped memory for tpu_custom_call.1']
    #allocation7 [shape = 'u8[16384]{0}', space=vmem, size = 0x4000, scoped, tag = 'output window, operand 0, single buffered']
    %7 = vsyncpa [#allocation3], 0
    %8 = vsyncpa [#allocation6], 0
    %9 = vsyncpa [#allocation4], 0
    // Predicated region
    $region2: #{tpu_custom_call.1} parent=1 // pred_check
      _
    $region3: #{tpu_custom_call.1} parent=1 // pred_check_branch
      %11 = sbr.rel (0) target = $region5
    $region4: #{tpu_custom_call.1} parent=1 // pred_region
      %s12 = sadd.s32 0, 0
      %s13 = smul.u32 2, %s12
      %15 = vsyncadd [#allocation3], 0
      %s16 = smul.addr %s13, 8
      %s17 = scalar_lea.hbm %s0, %s16
      %s18 = sshll.u32 %s17, 4
      %s19 = int_to_ptr.hbm [resolvable:$true] %s18
      %s20 = sshll.u32 [#allocation2], 4
      %s21 = int_to_ptr.vmem [resolvable:$true] %s20
      %26 = dma.hbm_to_vmem [thread:$0]  %s19, 256, %s21, [#allocation3], 128, 128, 8
    $region5: #{tpu_custom_call.1} parent=1 // pred_fallthru
      _
    // Predicated region
    $region6: #{tpu_custom_call.1} parent=1 // pred_check
      _
    $region7: #{tpu_custom_call.1} parent=1 // pred_check_branch
      %28 = sbr.rel (0) target = $region9
    $region8: #{tpu_custom_call.1} parent=1 // pred_region
      %s29 = sadd.s32 0, 0
      %s30 = smul.u32 2, %s29
      %32 = vsyncadd [#allocation6], 0
      %s33 = smul.addr %s30, 8
      %s34 = scalar_lea.hbm %s1, %s33
      %s35 = sshll.u32 %s34, 4
      %s36 = int_to_ptr.hbm [resolvable:$true] %s35
      %s37 = sshll.u32 [#allocation5], 4
      %s38 = int_to_ptr.vmem [resolvable:$true] %s37
      %43 = dma.hbm_to_vmem [thread:$0]  %s36, 256, %s38, [#allocation6], 128, 128, 8
    $region9: #{tpu_custom_call.1} parent=1 // pred_fallthru
      _
    // Predicated region
    $region10: #{tpu_custom_call.1} parent=1 // pred_check
      _
    $region11: #{tpu_custom_call.1} parent=1 // pred_check_branch
      %45 = sbr.rel (0) target = $region13
    $region12: #{tpu_custom_call.1} parent=1 // pred_region
      %47 = dma.done [#allocation3], 256
    $region13: #{tpu_custom_call.1} parent=1 // pred_fallthru
      _
    // Predicated region
    $region14: #{tpu_custom_call.1} parent=1 // pred_check
      _
    $region15: #{tpu_custom_call.1} parent=1 // pred_check_branch
      %49 = sbr.rel (0) target = $region17
    $region16: #{tpu_custom_call.1} parent=1 // pred_region
      %51 = dma.done [#allocation6], 256
    $region17: #{tpu_custom_call.1} parent=1 // pred_fallthru
      _
    %s52 = sadd.s32 0, 0
    %s53 = smul.u32 2, %s52
    %s54 = sadd.s32 0, 0
    %s55 = smul.u32 2, %s54
    %p56 = scmp.eq.s32.totalorder 0, 0
    // Predicated region
    $region18: #{tpu_custom_call.1} parent=1 // pred_check
      %p57 = pneg %p56
    $region19: #{tpu_custom_call.1} parent=1 // pred_check_branch
      %59 = sbr.rel (%p57) target = $region21
    $region20: #{tpu_custom_call.1} parent=1 // pred_region
      %60 = vst [vmem:[#allocation7] sm:$0xff] 0.0
      %61 = vst [vmem:[#allocation7 + $0x8] sm:$0xff] 0.0
      %62 = vst [vmem:[#allocation7 + $0x10] sm:$0xff] 0.0
      %63 = vst [vmem:[#allocation7 + $0x18] sm:$0xff] 0.0
    $region21: #{tpu_custom_call.1} parent=1 // pred_fallthru
      _
    %v64 = vld [vmem:[#allocation2] sm:$0xff]
    %v65 = vld [vmem:[#allocation2 + $0x8] sm:$0xff]
    %v66 = vld [vmem:[#allocation5] sm:$0xff]
    %v67 = vld [vmem:[#allocation5 + $0x8] sm:$0xff]
    %v68 = vsub.f32 0.0, %v64
    %v69 = vsub.f32 0.0, %v65
    %v70 = vmax.f32 %v68, 0.0
    %v71 = vmax.f32 %v69, 0.0
    %v72 = vand.u32 2147483647, %v64
    %v73 = vand.u32 2147483647, %v65
    %v74 = vsub.f32 0.0, %v72
    %v75 = vsub.f32 0.0, %v73
    %v76 = vmul.f32 %v74, 1.442695
    %v77 = vpow.pop %v76
    %v78 = vmul.f32 %v75, 1.442695
    %v79 = vpow.pop %v78
    %v80 = vadd.f32 %v77, 1.0
    %v81 = vlog2.pop %v80
    %v82 = vmul.f32 %v81, 0.6931472
    %v83 = vmul.f32 -0.5, %v77
    %v84 = vadd.f32 %v83, 1.0
    %v85 = vmul.f32 %v84, %v77
    %v86 = vand.u32 2147483647, %v77
    %vm87 = vcmp.lt.f32.partialorder %v86, 0.0004427343
    %v88 = vsel %vm87, %v85, %v82
    %v89 = vadd.f32 %v79, 1.0
    %v90 = vlog2.pop %v89
    %v91 = vmul.f32 %v90, 0.6931472
    %v92 = vmul.f32 -0.5, %v79
    %v93 = vadd.f32 %v92, 1.0
    %v94 = vmul.f32 %v93, %v79
    %v95 = vand.u32 2147483647, %v79
    %vm96 = vcmp.lt.f32.partialorder %v95, 0.0004427343
    %v97 = vsel %vm96, %v94, %v91
    %v98 = vadd.f32 %v70, %v88
    %v99 = vadd.f32 %v71, %v97
    %v100 = vsub.f32 1.0, %v66
    %v101 = vsub.f32 1.0, %v67
    %v102 = vmul.f32 %v100, %v64
    %v103 = vmul.f32 %v101, %v65
    %v104 = vmul.f32 %v66, 0.7
    %v105 = vmul.f32 %v67, 0.7
    %v106 = vadd.f32 %v104, 1.0
    %v107 = vadd.f32 %v105, 1.0
    %v108 = vsub.f32 %v106, %v66
    %v109 = vsub.f32 %v107, %v67
    %v110 = vmul.f32 %v108, %v98
    %v111 = vmul.f32 %v109, %v99
    %v112 = vadd.f32 %v102, %v110
    %v113 = vadd.f32 %v103, %v111
    %v114 = vld [vmem:[#allocation7] sm:$0xff]
    %v115 = vadd.f32 %v112, %v113
    %v116 = vadd.f32 %v114, %v115
    %117 = vst [vmem:[#allocation7] sm:$0xff] %v116
    %s118 = scalar_lea.vmem [#allocation7], 8
    %v119 = vld [vmem:[%s118] sm:$0xff]
    %v120 = vmul.f32 %v64, %v66
    %v121 = vmul.f32 %v65, %v67
    %v122 = vadd.f32 %v120, %v121
    %v123 = vadd.f32 %v119, %v122
    %124 = vst [vmem:[%s118] sm:$0xff] %v123
    %s125 = scalar_lea.vmem [#allocation7], 16
    %v126 = vld [vmem:[%s125] sm:$0xff]
    %v127 = vadd.f32 %v64, %v65
    %v128 = vadd.f32 %v126, %v127
    %129 = vst [vmem:[%s125] sm:$0xff] %v128
    %s130 = scalar_lea.vmem [#allocation7], 24
    %v131 = vld [vmem:[%s130] sm:$0xff]
    %v132 = vadd.f32 %v66, %v67
    %v133 = vadd.f32 %v131, %v132
    %134 = vst [vmem:[%s130] sm:$0xff] %v133
    // Predicated region
    $region22: #{tpu_custom_call.1} parent=1 // pred_check
      _
    $region23: #{tpu_custom_call.1} parent=1 // pred_check_branch
      %136 = sbr.rel (0) target = $region25
    $region24: #{tpu_custom_call.1} parent=1 // pred_region
      %138 = vsyncadd [#allocation4], 0
      %s139 = sshll.u32 [#allocation7], 4
      %s140 = int_to_ptr.vmem [resolvable:$true] %s139
      %s141 = sshll.u32 %s2, 4
      %s142 = int_to_ptr.hbm [resolvable:$true] %s141
      %147 = dma.vmem_to_hbm [thread:$0]  %s140, 512, %s142, [#allocation4], 128, 128, 8
    $region25: #{tpu_custom_call.1} parent=1 // pred_fallthru
      _
    // Predicated region
    $region26: #{tpu_custom_call.1} parent=1 // pred_check
      _
    $region27: #{tpu_custom_call.1} parent=1 // pred_check_branch
      %149 = sbr.rel (0) target = $region29
    $region28: #{tpu_custom_call.1} parent=1 // pred_region
      %151 = dma.done [#allocation4], 512
    $region29: #{tpu_custom_call.1} parent=1 // pred_fallthru
      _
    %152 = vsyncpa [#allocation3], 1
    %153 = vsyncpa [#allocation6], 1
    %154 = vsyncpa [#allocation4], 1

</llo_original>
